<compile_context>
chip_gen: v5e
topology: v5e:2x2
jax: 0.10.0
libtpu: 0.0.40
codegen_flags: <defaults>
</compile_context>

<pallas_src>
import functools
import math

import jax
import jax.numpy as jnp
from jax.experimental import pallas as pl
from jax.experimental.pallas import tpu as pltpu

_VMEM_LIMIT = 32 * 1024 * 1024
_EPS = 1e-5
_BN_SCALE = 1.0 / math.sqrt(1.0 + _EPS)   # folded eval-mode BN (gamma=1, beta=0, mean=0, var=1)


def _round_up(x, m):
    return (x + m - 1) // m * m


# ---------------------------------------------------------------------------
# Pallas kernels
# ---------------------------------------------------------------------------
def _mm_kernel(a_ref, b_ref, s_ref, c_ref, o_ref, acc_ref, *, relu):
    """o = maybe_relu((a @ b) * s + c): conv-as-matmul with fused BN / bias / ReLU epilogue."""
    @pl.when(pl.program_id(2) == 0)
    def _():
        acc_ref[...] = jnp.zeros_like(acc_ref)

    acc_ref[...] += jnp.dot(a_ref[...], b_ref[...],
                            preferred_element_type=jnp.float32)

    @pl.when(pl.program_id(2) == pl.num_programs(2) - 1)
    def _():
        y = acc_ref[...] * s_ref[...] + c_ref[...]
        if relu:
            y = jnp.maximum(y, 0.0)
        o_ref[...] = y.astype(o_ref.dtype)


def _mm_res_kernel(a_ref, b_ref, s_ref, c_ref, r_ref, o_ref, acc_ref, *, relu, relu_out):
    """Same as _mm_kernel, plus a fused residual add (and optional post-add ReLU)."""
    @pl.when(pl.program_id(2) == 0)
    def _():
        acc_ref[...] = jnp.zeros_like(acc_ref)

    acc_ref[...] += jnp.dot(a_ref[...], b_ref[...],
                            preferred_element_type=jnp.float32)

    @pl.when(pl.program_id(2) == pl.num_programs(2) - 1)
    def _():
        y = acc_ref[...] * s_ref[...] + c_ref[...]
        if relu:
            y = jnp.maximum(y, 0.0)
        y = y + r_ref[...].astype(jnp.float32)
        if relu_out:
            y = jnp.maximum(y, 0.0)
        o_ref[...] = y.astype(o_ref.dtype)


def _max4_kernel(a_ref, b_ref, c_ref, d_ref, o_ref):
    o_ref[...] = jnp.maximum(jnp.maximum(a_ref[...], b_ref[...]),
                             jnp.maximum(c_ref[...], d_ref[...]))


# ---------------------------------------------------------------------------
# Matmul wrapper (per-layer tile selection, pre-padded bf16 weights)
# ---------------------------------------------------------------------------
def _pick_tiles(M, Kp, Np):
    tm = min(256, _round_up(M, 16))          # don't pad tiny-M layers up to 128/256
    Mp = _round_up(M, tm)
    tn = 256 if Np % 256 == 0 else 128       # fill the 256-wide MXU on v6e/v7x when possible
    tk = min(Kp, 2048)
    while Kp % tk:                           # largest 128-multiple divisor of Kp (<= 2048)
        tk -= 128
    return tm, Mp, tn, tk


def matmul_affine(a, mm, *, relu, residual=None, relu_out=False, out_dtype=jnp.bfloat16):
    """a:(M,K) bf16 @ mm['w']:(Kp,Np) bf16 with f32 accumulation and fused epilogue.

    mm holds the weight matrix / scale / bias already padded and cast at init time.
    """
    M, K = a.shape
    Kp, Np = mm["w"].shape
    N = mm["n"]
    a = a.astype(jnp.bfloat16)
    if K != Kp:
        a = jnp.pad(a, ((0, 0), (0, Kp - K)))
    tm, Mp, tn, tk = _pick_tiles(M, Kp, Np)
    if Mp != M:
        a = jnp.pad(a, ((0, Mp - M), (0, 0)))

    in_specs = [
        pl.BlockSpec((tm, tk), lambda i, j, k: (i, k)),
        pl.BlockSpec((tk, tn), lambda i, j, k: (k, j)),
        pl.BlockSpec((1, tn), lambda i, j, k: (0, j)),
        pl.BlockSpec((1, tn), lambda i, j, k: (0, j)),
    ]
    args = [a, mm["w"], mm["s"], mm["c"]]
    if residual is None:
        kern = functools.partial(_mm_kernel, relu=relu)
    else:
        r = residual.astype(jnp.bfloat16)
        rM, rN = r.shape
        if (rM, rN) != (Mp, Np):
            r = jnp.pad(r, ((0, Mp - rM), (0, Np - rN)))
        in_specs.append(pl.BlockSpec((tm, tn), lambda i, j, k: (i, j)))
        args.append(r)
        kern = functools.partial(_mm_res_kernel, relu=relu, relu_out=relu_out)

    out = pl.pallas_call(
        kern,
        out_shape=jax.ShapeDtypeStruct((Mp, Np), out_dtype),
        grid_spec=pltpu.PrefetchScalarGridSpec(
            num_scalar_prefetch=0,
            grid=(Mp // tm, Np // tn, Kp // tk),
            in_specs=in_specs,
            out_specs=pl.BlockSpec((tm, tn), lambda i, j, k: (i, j)),
            scratch_shapes=[pltpu.VMEM((tm, tn), jnp.float32)],
        ),
        compiler_params=pltpu.CompilerParams(
            dimension_semantics=("parallel", "parallel", "arbitrary"),
            vmem_limit_bytes=_VMEM_LIMIT),
    )(*args)
    if (Mp, Np) != (M, N):
        out = out[:M, :N]
    return out


# ---------------------------------------------------------------------------
# Conv / pool wrappers (XLA glue around the Pallas matmul kernel)
# ---------------------------------------------------------------------------
def conv2d_nhwc(x, p, *, stride, pad, relu, residual=None, relu_out=False,
                out_dtype=jnp.bfloat16):
    """x:(N,H,W,Cin) NHWC conv via bf16 im2col + Pallas matmul with fused epilogue."""
    N, H, W, Cin = x.shape
    kh, kw, cout = p["kh"], p["kw"], p["n"]
    x = x.astype(jnp.bfloat16)
    if pad:
        x = jnp.pad(x, ((0, 0), (pad, pad), (pad, pad), (0, 0)))
    Ho = (H + 2 * pad - kh) // stride + 1
    Wo = (W + 2 * pad - kw) // stride + 1
    if kh == 1 and kw == 1 and stride == 1:
        a = x.reshape(N * Ho * Wo, Cin)
    else:
        # TODO(synk): taps are still materialized via im2col in HBM; folding the kh*kw taps
        # into the reduction grid would cut activation traffic at larger batch/resolution.
        cols = [x[:, di:di + stride * (Ho - 1) + 1:stride,
                  dj:dj + stride * (Wo - 1) + 1:stride, :]
                for di in range(kh) for dj in range(kw)]
        a = jnp.concatenate(cols, axis=-1).reshape(N * Ho * Wo, kh * kw * Cin)
    res = None if residual is None else residual.reshape(N * Ho * Wo, cout)
    out = matmul_affine(a, p, relu=relu, residual=res, relu_out=relu_out,
                        out_dtype=out_dtype)
    return out.reshape(N, Ho, Wo, cout)


def conv_transpose2d_nhwc(x, p, *, residual=None, out_dtype=jnp.bfloat16):
    """ConvTranspose2d(k=2s, stride=s, pad=s//2, bias=False) via sub-pixel decomposition.

    The s*s output phases are grouped into 4 groups sharing a 2x2 input window; each group is
    one Pallas matmul that streams exactly its weight taps (no zero-insertion), with the
    optional skip-add fused into its epilogue.  Outputs are interleaved with a reshape.
    """
    N, H, W, Cin = x.shape
    s, s2, Cout = p["stride"], p["s2"], p["cout"]
    xp = jnp.pad(x.astype(jnp.bfloat16), ((0, 0), (1, 1), (1, 1), (0, 0)))
    M = N * H * W
    r6 = None
    if residual is not None:
        r6 = residual.reshape(N, H, 2, s2, W, 2, s2, Cout)
    grp_rows = []
    for gy in (0, 1):
        row = []
        for gx in (0, 1):
            cols = [xp[:, gy + dy:gy + dy + H, gx + dx:gx + dx + W, :]
                    for dy in (0, 1) for dx in (0, 1)]
            a = jnp.concatenate(cols, axis=-1).reshape(M, 4 * Cin)
            res = None
            if r6 is not None:
                res = jnp.transpose(r6[:, :, gy, :, :, gx, :, :],
                                    (0, 1, 3, 2, 4, 5)).reshape(M, s2 * s2 * Cout)
            g = matmul_affine(a, p["groups"][(gy, gx)], relu=False,
                              residual=res, out_dtype=out_dtype)
            row.append(g.reshape(N, H, W, s2, s2, Cout))
        grp_rows.append(jnp.stack(row))
    g = jnp.stack(grp_rows)                            # (gy, gx, n, qy, qx, ry, cx, co)
    out = jnp.transpose(g, (2, 3, 0, 5, 4, 1, 6, 7))   # (n, qy, gy, ry, qx, gx, cx, co)
    return out.reshape(N, s * H, s * W, Cout)


def maxpool_2x2_ceil(x):
    """MaxPool2d(kernel=2, stride=2, ceil_mode=True) on NHWC via a row-tiled 4-way Pallas max."""
    N, H, W, C = x.shape
    ph, pw = H % 2, W % 2
    if ph or pw:
        x = jnp.pad(x, ((0, 0), (0, ph), (0, pw), (0, 0)), constant_values=-jnp.inf)
    Ho, Wo = (H + ph) // 2, (W + pw) // 2
    R, L = N * Ho, Wo * C                               # lane dim = Wo*C (>= 128)
    views = [x[:, i::2, j::2, :].reshape(R, L) for i in (0, 1) for j in (0, 1)]
    itemsize = jnp.dtype(x.dtype).itemsize
    br = R
    for cand in (2048, 1024, 512, 256, 128, 64, 32, 16, 8):
        if R % cand == 0 and cand * L * itemsize <= (2 << 20):
            br = cand
            break
    out = pl.pallas_call(
        _max4_kernel,
        out_shape=jax.ShapeDtypeStruct((R, L), x.dtype),
        grid=(R // br,),
        in_specs=[pl.BlockSpec((br, L), lambda i: (i, 0))] * 4,
        out_specs=pl.BlockSpec((br, L), lambda i: (i, 0)),
        compiler_params=pltpu.CompilerParams(dimension_semantics=("parallel",)),
    )(*views)
    return out.reshape(N, Ho, Wo, C)


# ---------------------------------------------------------------------------
# Parameter preparation (weights padded / reshaped / cast to bf16 ONCE at init)
# ---------------------------------------------------------------------------
class _KeyGen:
    def __init__(self, key):
        self._key = key

    def __call__(self):
        self._key, sub = jax.random.split(self._key)
        return sub


def _prep_matmul(w2d, scale, bias):
    K, N = w2d.shape
    Kp, Np = _round_up(K, 128), _round_up(N, 128)
    w = jnp.pad(w2d, ((0, Kp - K), (0, Np - N))).astype(jnp.bfloat16)
    s = jnp.pad(scale.astype(jnp.float32), (0, Np - N)).reshape(1, Np)
    c = jnp.pad(bias.astype(jnp.float32), (0, Np - N)).reshape(1, Np)
    return {"w": w, "s": s, "c": c, "n": N}


def _prep_conv(w4d, scale, bias):
    kh, kw, cin, cout = w4d.shape
    d = _prep_matmul(w4d.reshape(kh * kw * cin, cout), scale, bias)
    d["kh"], d["kw"] = kh, kw
    return d


def _prep_deconv(w_t):
    """PyTorch ConvTranspose2d weight (Cin,Cout,k,k), stride=k//2, pad=k//4 ->
    4 per-group 2x2-tap weight matrices for the sub-pixel decomposition."""
    Cin, Cout, k, _ = w_t.shape
    s = k // 2
    s2 = s // 2
    ones = jnp.ones((s2 * s2 * Cout,), jnp.float32)
    zeros = jnp.zeros((s2 * s2 * Cout,), jnp.float32)
    groups = {}
    for gy in (0, 1):
        for gx in (0, 1):
            rows = []
            for dy in (0, 1):
                for dx in (0, 1):
                    ky = jnp.arange(s2) + s2 * (1 - gy) + s * (1 - dy)
                    kx = jnp.arange(s2) + s2 * (1 - gx) + s * (1 - dx)
                    sub = w_t[:, :, ky[:, None], kx[None, :]]        # (Cin, Cout, s2, s2)
                    rows.append(jnp.transpose(sub, (0, 2, 3, 1))
                                .reshape(Cin, s2 * s2 * Cout))
            b = jnp.concatenate(rows, axis=0)                        # (4*Cin, s2*s2*Cout)
            groups[(gy, gx)] = _prep_matmul(b, ones, zeros)
    return {"groups": groups, "stride": s, "s2": s2, "cout": Cout}


def _init_conv_bn(kg, cin, cout, k):
    std = math.sqrt(2.0 / (cin * k * k))
    w = jax.random.normal(kg(), (k, k, cin, cout), jnp.float32) * std
    return _prep_conv(w, jnp.full((cout,), _BN_SCALE, jnp.float32),
                      jnp.zeros((cout,), jnp.float32))


def _init_block(kg, cin, cout, stride, use_1x1):
    p = {"conv1": _init_conv_bn(kg, cin, cin, 3),
         "conv2": _init_conv_bn(kg, cin, cin, 3),
         "conv3": _init_conv_bn(kg, cin, cout, 3),
         "stride": stride, "use_1x1": use_1x1}
    if use_1x1:
        p["split"] = _init_conv_bn(kg, cin, cout, 1)
    return p


def init_resnet_fcn(key, num_classes):
    kg = _KeyGen(key)
    params = {"stage1_conv": _init_conv_bn(kg, 3, 64, 7)}
    # TODO(synk): the reference stages are not channel-consistent (e.g. Block(256,1024,False)
    # is re-applied to a 1024-ch input and Block(128,512,False) adds a 512-ch path to a 128-ch
    # residual), so the literal PyTorch forward cannot run.  Minimal fix kept from the previous
    # version: block input channels are corrected to the actual incoming channel count and the
    # 1x1 projection is enabled whenever in-channels != out-channels.
    stage_cfgs = {
        "stage2": [(64, 256, 1, True), (256, 256, 1, False), (256, 256, 1, False)],
        "stage3": [(256, 128, 2, True), (128, 512, 1, True),
                   (512, 512, 1, False), (512, 512, 1, False)],
        "stage4": [(512, 256, 2, True), (256, 1024, 1, True),
                   (1024, 1024, 1, False), (1024, 1024, 1, False),
                   (1024, 1024, 1, False), (1024, 1024, 1, False)],
        "stage5": [(1024, 512, 2, True), (512, 2048, 1, True), (2048, 2048, 1, False)],
    }
    for name, cfg in stage_cfgs.items():
        params[name] = [_init_block(kg, *c) for c in cfg]

    def head_1x1(cin, cout):                     # 1x1 convs with bias=True (no BN)
        w = jax.random.normal(kg(), (1, 1, cin, cout), jnp.float32) * math.sqrt(1.0 / cin)
        b = jax.random.normal(kg(), (cout,), jnp.float32) * 0.01
        return _prep_conv(w, jnp.ones((cout,), jnp.float32), b)

    def deconv(cin, cout, k):                    # ConvTranspose2d, bias=False
        w = jax.random.normal(kg(), (cin, cout, k, k), jnp.float32) \
            * math.sqrt(1.0 / (cin * k * k))
        return _prep_deconv(w)

    params["conv_trans1"] = head_1x1(2048, 1024)
    params["conv_trans2"] = head_1x1(1024, 512)
    params["conv_trans3"] = head_1x1(512, num_classes)
    params["up2x_1"] = deconv(1024, 1024, 4)
    params["up2x_2"] = deconv(512, 512, 4)
    params["up8x"] = deconv(num_classes, num_classes, 16)
    return params


# ---------------------------------------------------------------------------
# Forward pass
# ---------------------------------------------------------------------------
def block_forward(p, x):
    x1 = conv2d_nhwc(x, p["conv1"], stride=1, pad=1, relu=True)
    x2 = conv2d_nhwc(x1, p["conv2"], stride=p["stride"], pad=1, relu=True)
    if p["use_1x1"]:
        skip = conv2d_nhwc(x, p["split"], stride=p["stride"], pad=0, relu=False)
    else:
        skip = x
    # reference: out = relu(relu(bn(conv3(x2))) + skip) -- both ReLUs fused in the epilogue
    return conv2d_nhwc(x2, p["conv3"], stride=1, pad=1, relu=True,
                       residual=skip, relu_out=True)


def resnet_fcn_forward(params, x_nchw):
    x = jnp.transpose(x_nchw, (0, 2, 3, 1)).astype(jnp.bfloat16)   # NCHW -> NHWC
    s1 = conv2d_nhwc(x, params["stage1_conv"], stride=2, pad=3, relu=True)
    s1 = maxpool_2x2_ceil(s1)

    def run_stage(name, t):
        for bp in params[name]:
            t = block_forward(bp, t)
        return t

    s2 = run_stage("stage2", s1)
    s3 = run_stage("stage3", s2)
    s4 = run_stage("stage4", s3)
    s5 = run_stage("stage5", s4)

    # FCN head; the skip adds (add0 + s4, add1 + s3) are fused into the upsample epilogues.
    add0 = conv2d_nhwc(s5, params["conv_trans1"], stride=1, pad=0, relu=False)
    add1 = conv_transpose2d_nhwc(add0, params["up2x_1"], residual=s4)
    add1 = conv2d_nhwc(add1, params["conv_trans2"], stride=1, pad=0, relu=False)
    add2 = conv_transpose2d_nhwc(add1, params["up2x_2"], residual=s3)
    add2 = conv2d_nhwc(add2, params["conv_trans3"], stride=1, pad=0, relu=False)
    out = conv_transpose2d_nhwc(add2, params["up8x"], out_dtype=jnp.float32)
    return jnp.transpose(out, (0, 3, 1, 2)).astype(jnp.float32)    # NHWC -> NCHW


if __name__ == "__main__":
    num_classes = 5
    key = jax.random.PRNGKey(0)
    pkey, xkey = jax.random.split(key)
    params = init_resnet_fcn(pkey, num_classes)
    x = jax.random.normal(xkey, (2, 3, 64, 64), jnp.float32)       # NCHW like the PyTorch module
    out = resnet_fcn_forward(params, x)
    out = jax.block_until_ready(out)
    assert out.shape == (2, num_classes, 64, 64), out.shape
    assert bool(jnp.all(jnp.isfinite(out)))
    print("KERNEL_OK")
</pallas_src>

<mosaic_0001>
module attributes {stable_mosaic.version = 11 : i64} {
  func.func @_mm_kernel(%arg0: i32, %arg1: i32, %arg2: i32, %arg3: memref<256x256xbf16, #tpu.memory_space<vmem>>, %arg4: memref<256x128xbf16, #tpu.memory_space<vmem>>, %arg5: memref<1x128xf32, #tpu.memory_space<vmem>>, %arg6: memref<1x128xf32, #tpu.memory_space<vmem>>, %arg7: memref<256x128xbf16, #tpu.memory_space<vmem>>, %arg8: memref<256x128xf32, #tpu.memory_space<vmem>>) attributes {dimension_semantics = [#tpu.dimension_semantics<parallel>, #tpu.dimension_semantics<parallel>, #tpu.dimension_semantics<arbitrary>], iteration_bounds = array<i64: 8, 1, 1>, scalar_prefetch = 0 : i64, scratch_operands = 1 : i64, tpu.core_type = #tpu.core_type<tc>, window_params = [{transform_indices = @transform_0, window_bounds = array<i64: 256, 256>}, {transform_indices = @transform_1, window_bounds = array<i64: 256, 128>}, {transform_indices = @transform_2, window_bounds = array<i64: 1, 128>}, {transform_indices = @transform_3, window_bounds = array<i64: 1, 128>}, {transform_indices = @transform_4, window_bounds = array<i64: 256, 128>}]} {
    %c0_i32 = arith.constant 0 : i32
    %0 = arith.cmpi eq, %arg2, %c0_i32 : i32
    %1 = arith.extui %0 : i1 to i32
    %c0_i32_0 = arith.constant 0 : i32
    %2 = arith.cmpi ne, %1, %c0_i32_0 : i32
    scf.if %2 {
      %cst_10 = arith.constant 0.000000e+00 : f32
      %12 = vector.broadcast %cst_10 : f32 to vector<256x128xf32>
      %c0_11 = arith.constant 0 : index
      %c0_12 = arith.constant 0 : index
      %13 = vector.load %arg8[%c0_11, %c0_12] : memref<256x128xf32, #tpu.memory_space<vmem>>, vector<256x128xf32>
      tpu.vector_store %arg8[%c0_11, %c0_12], %12 {strides = array<i32>} : memref<256x128xf32, #tpu.memory_space<vmem>>, vector<256x128xf32>,
    } else {
    }
    %c0 = arith.constant 0 : index
    %c0_1 = arith.constant 0 : index
    %3 = vector.load %arg8[%c0, %c0_1] : memref<256x128xf32, #tpu.memory_space<vmem>>, vector<256x128xf32>
    %c0_2 = arith.constant 0 : index
    %c0_3 = arith.constant 0 : index
    %4 = vector.load %arg3[%c0_2, %c0_3] : memref<256x256xbf16, #tpu.memory_space<vmem>>, vector<256x256xbf16>
    %c0_4 = arith.constant 0 : index
    %c0_5 = arith.constant 0 : index
    %5 = vector.load %arg4[%c0_4, %c0_5] : memref<256x128xbf16, #tpu.memory_space<vmem>>, vector<256x128xbf16>
    %cst = arith.constant dense<0.000000e+00> : vector<256x128xf32>
    %6 = tpu.matmul %4, %5, %cst {dimension_numbers = #tpu.dot_dimension_numbers<[1], [0], [0], [1], [0, 0, 1, 1], [], []>} : vector<256x256xbf16>, vector<256x128xbf16>, vector<256x128xf32> -> vector<256x128xf32>
    %7 = arith.addf %3, %6 : vector<256x128xf32>
    %c0_6 = arith.constant 0 : index
    %c0_7 = arith.constant 0 : index
    %8 = vector.load %arg8[%c0_6, %c0_7] : memref<256x128xf32, #tpu.memory_space<vmem>>, vector<256x128xf32>
    tpu.vector_store %arg8[%c0_6, %c0_7], %7 {strides = array<i32>} : memref<256x128xf32, #tpu.memory_space<vmem>>, vector<256x128xf32>,
    %c0_i32_8 = arith.constant 0 : i32
    %9 = arith.cmpi eq, %arg2, %c0_i32_8 : i32
    %10 = arith.extui %9 : i1 to i32
    %c0_i32_9 = arith.constant 0 : i32
    %11 = arith.cmpi ne, %10, %c0_i32_9 : i32
    scf.if %11 {
      %c0_10 = arith.constant 0 : index
      %c0_11 = arith.constant 0 : index
      %12 = vector.load %arg8[%c0_10, %c0_11] : memref<256x128xf32, #tpu.memory_space<vmem>>, vector<256x128xf32>
      %c0_12 = arith.constant 0 : index
      %c0_13 = arith.constant 0 : index
      %13 = vector.load %arg5[%c0_12, %c0_13] : memref<1x128xf32, #tpu.memory_space<vmem>>, vector<1x128xf32>
      %14 = vector.broadcast %13 : vector<1x128xf32> to vector<256x128xf32>
      %15 = arith.mulf %12, %14 : vector<256x128xf32>
      %c0_14 = arith.constant 0 : index
      %c0_15 = arith.constant 0 : index
      %16 = vector.load %arg6[%c0_14, %c0_15] : memref<1x128xf32, #tpu.memory_space<vmem>>, vector<1x128xf32>
      %17 = vector.broadcast %16 : vector<1x128xf32> to vector<256x128xf32>
      %18 = arith.addf %15, %17 : vector<256x128xf32>
      %cst_16 = arith.constant 0.000000e+00 : f32
      %19 = vector.broadcast %cst_16 : f32 to vector<256x128xf32>
      %20 = arith.maximumf %18, %19 : vector<256x128xf32>
      %21 = arith.truncf %20 : vector<256x128xf32> to vector<256x128xbf16>
      %c0_17 = arith.constant 0 : index
      %c0_18 = arith.constant 0 : index
      %22 = vector.load %arg7[%c0_17, %c0_18] : memref<256x128xbf16, #tpu.memory_space<vmem>>, vector<256x128xbf16>
      tpu.vector_store %arg7[%c0_17, %c0_18], %21 {strides = array<i32>} : memref<256x128xbf16, #tpu.memory_space<vmem>>, vector<256x128xbf16>,
    } else {
    }
    return
  }
  func.func @transform_0(%arg0: i32, %arg1: i32, %arg2: i32) -> (i32, i32) {
    %c0_i32 = arith.constant 0 : i32
    return %arg0, %arg2 : i32, i32
  }
  func.func @transform_1(%arg0: i32, %arg1: i32, %arg2: i32) -> (i32, i32) {
    %c0_i32 = arith.constant 0 : i32
    return %arg2, %arg1 : i32, i32
  }
  func.func @transform_2(%arg0: i32, %arg1: i32, %arg2: i32) -> (i32, i32) {
    %c0_i32 = arith.constant 0 : i32
    %c0_i32_0 = arith.constant 0 : i32
    return %c0_i32, %arg1 : i32, i32
  }
  func.func @transform_3(%arg0: i32, %arg1: i32, %arg2: i32) -> (i32, i32) {
    %c0_i32 = arith.constant 0 : i32
    %c0_i32_0 = arith.constant 0 : i32
    return %c0_i32, %arg1 : i32, i32
  }
  func.func @transform_4(%arg0: i32, %arg1: i32, %arg2: i32) -> (i32, i32) {
    %c0_i32 = arith.constant 0 : i32
    return %arg0, %arg1 : i32, i32
  }
}

</mosaic_0001>

<llo_original>
// kernel: tpu_custom_call.1
$region0: #{tpu_custom_call.1}
  #allocation0 [shape = 'u32[]', space=smem, size = 0x4, offset = 0x4, fixed_abs, tag = 'smem constant byte address 0x4 - core index']
  #allocation1 [shape = 'u32[72,128]{1,0:T(1,128)}', space=vmem, size = 0x9000, scoped, tag = 'internal scratch']
  #allocation2 [shape = 'f32[256,128]{1,0:T(8,128)}', space=vmem, size = 0x20000, scoped, tag = 'scratch operand']
  %s0 = inlined_call_operand.hbm [shape: bf16[2048,256], index: 0, kind: input, shape index: {}]
  %s1 = inlined_call_operand.hbm [shape: bf16[256,128], index: 1, kind: input, shape index: {}]
  %s2 = inlined_call_operand.vmem [shape: f32[1,128], index: 2, kind: input, shape index: {}]
  %s3 = inlined_call_operand.vmem [shape: f32[1,128], index: 3, kind: input, shape index: {}]
  %s4 = inlined_call_operand.hbm [shape: bf16[2048,128], index: 4, kind: output, shape index: {}]
  %s5 = sld [smem:[#allocation0]]
  $region65: #{tpu_custom_call.1} parent=0
    _
  %s7 = ssub.s32 1, %s5
  %s8 = scalar_select 0, %s7, %s5
  $region1: #{tpu_custom_call.1} parent=0
    #allocation3 [shape = 'u8[262144]{0}', space=vmem, size = 0x40000, scoped, tag = 'input window, operand 0']
    #allocation4 [shape = 's32[2]{0}', space=sflag, size = 0x8, scoped, tag = 'scoped memory for tpu_custom_call.1']
    #allocation5 [shape = 's32[2]{0}', space=sflag, size = 0x8, scoped, tag = 'scoped memory for tpu_custom_call.1']
    #allocation6 [shape = 'u8[65536]{0}', space=vmem, size = 0x10000, scoped, tag = 'input window, operand 1, single buffered']
    #allocation7 [shape = 's32[1]{0}', space=sflag, size = 0x4, scoped, tag = 'scoped memory for tpu_custom_call.1']
    #allocation8 [shape = 'u8[131072]{0}', space=vmem, size = 0x20000, scoped, tag = 'output window, operand 0']
    %9 = vsyncpa [#allocation4], 0
    %s10 = scalar_lea.sflag [#allocation4], 1
    %11 = vsyncpa %s10, 0
    %12 = vsyncpa [#allocation7], 0
    %13 = vsyncpa [#allocation5], 0
    %s14 = scalar_lea.sflag [#allocation5], 1
    %15 = vsyncpa %s14, 0
    loop: start=0, step=1, limit=10
    $region2: #{tpu_custom_call.1} parent=1 // loop_pre_header
      _
    $region3: #{tpu_custom_call.1} parent=1 // loop_header
      %s17 = sphi 0, %s21
      %p18 = scmp.ge.s32.totalorder %s17, 10
      %s24 = sphi 0, %s43
      %s25 = sphi 0, %s39
      %s26 = sphi 0, %s35
      %s27 = sphi 0, %s24
      %s28 = sphi 0, %s25
      %s29 = sphi 0, %s26
      %s30 = sphi 0, %s27
      %s31 = sphi 0, %s28
      %s32 = sphi 0, %s29
      %s48 = sphi 0, %s50
      %s51 = sphi 0, %s48
      %s52 = sphi 0, %s51
      %s68 = sphi 0, %s52
      %s76 = sphi 0, %s78
      %s79 = sphi 0, %s76
      %s80 = sphi 0, %s79
      %s96 = sphi 0, %s80
      %s102 = sphi 0, %s104
      %s105 = sphi 0, %s102
      %s106 = sphi 0, %s105
      %s122 = sphi 0, %s106
      %s128 = sphi 0, %s130
      %s131 = sphi 0, %s128
      %s132 = sphi 0, %s131
      %s148 = sphi 0, %s132
      %s156 = sphi 0, %s158
      %s159 = sphi 0, %s156
      %s160 = sphi 0, %s159
      %s176 = sphi 0, %s160
    $region4: #{tpu_custom_call.1} parent=1 // loop_header_branch
      %20 = sbr.rel (%p18) target = $region8
    $region5: #{tpu_custom_call.1} parent=1 // loop_body
      %s22 = ssub.s32 %s17, 1
      %s23 = ssub.s32 %s17, 2
      %s33 = sadd.s32 1, %s26
      %p34 = scmp.ge.s32.totalorder %s33, 1
      %s35 = scalar_select %p34, 0, %s33
      %s36 = sadd.s32 1, %s25
      %s37 = scalar_select %p34, %s36, %s25
      %p38 = scmp.ge.s32.totalorder %s37, 1
      %s39 = scalar_select %p38, 0, %s37
      %s40 = sadd.s32 1, %s24
      %s41 = scalar_select %p38, %s40, %s24
      %p42 = scmp.ge.s32.totalorder %s41, 8
      %s43 = scalar_select %p42, 0, %s41
      %s44 = ssub.s32 %s24, %s43
      %s45 = ssub.s32 %s26, %s35
      %s46 = sor.u32 %s44, %s45
      %p47 = scmp.eq.s32.totalorder %s46, 0
      %s49 = sadd.s32 %s48, 1
      %s50 = scalar_select %p47, %s48, %s49
      %p53 = pneg %p47
      %p54 = scmp.eq.s32.totalorder %s17, 7
      %p55 = por %p53, %p54
      %p56 = scmp.ne.s32.totalorder %s48, %s51
      %p57 = scmp.eq.s32.totalorder %s17, 0
      %p58 = por %p56, %p57
      %p59 = scmp.ne.s32.totalorder %s48, %s51
      %p60 = scmp.eq.s32.totalorder %s22, 7
      %p61 = por %p59, %p60
      %p62 = scmp.ne.s32.totalorder %s51, %s52
      %p63 = scmp.eq.s32.totalorder %s22, 0
      %p64 = por %p62, %p63
      %p65 = scmp.ne.s32.totalorder %s51, %s52
      %p66 = scmp.eq.s32.totalorder %s23, 7
      %p67 = por %p65, %p66
      %p69 = scmp.ne.s32.totalorder %s52, %s68
      %p70 = scmp.eq.s32.totalorder %s23, 0
      %p71 = por %p69, %p70
      %s72 = ssub.s32 %s26, %s35
      %s73 = ssub.s32 %s25, %s39
      %s74 = sor.u32 %s72, %s73
      %p75 = scmp.eq.s32.totalorder %s74, 0
      %s77 = sadd.s32 %s76, 1
      %s78 = scalar_select %p75, %s76, %s77
      %p81 = pneg %p75
      %p82 = scmp.eq.s32.totalorder %s17, 7
      %p83 = por %p81, %p82
      %p84 = scmp.ne.s32.totalorder %s76, %s79
      %p85 = scmp.eq.s32.totalorder %s17, 0
      %p86 = por %p84, %p85
      %p87 = scmp.ne.s32.totalorder %s76, %s79
      %p88 = scmp.eq.s32.totalorder %s22, 7
      %p89 = por %p87, %p88
      %p90 = scmp.ne.s32.totalorder %s79, %s80
      %p91 = scmp.eq.s32.totalorder %s22, 0
      %p92 = por %p90, %p91
      %p93 = scmp.ne.s32.totalorder %s79, %s80
      %p94 = scmp.eq.s32.totalorder %s23, 7
      %p95 = por %p93, %p94
      %p97 = scmp.ne.s32.totalorder %s80, %s96
      %p98 = scmp.eq.s32.totalorder %s23, 0
      %p99 = por %p97, %p98
      %s100 = ssub.s32 %s25, %s39
      %p101 = scmp.eq.s32.totalorder %s100, 0
      %s103 = sadd.s32 %s102, 1
      %s104 = scalar_select %p101, %s102, %s103
      %p107 = pneg %p101
      %p108 = scmp.eq.s32.totalorder %s17, 7
      %p109 = por %p107, %p108
      %p110 = scmp.ne.s32.totalorder %s102, %s105
      %p111 = scmp.eq.s32.totalorder %s17, 0
      %p112 = por %p110, %p111
      %p113 = scmp.ne.s32.totalorder %s102, %s105
      %p114 = scmp.eq.s32.totalorder %s22, 7
      %p115 = por %p113, %p114
      %p116 = scmp.ne.s32.totalorder %s105, %s106
      %p117 = scmp.eq.s32.totalorder %s22, 0
      %p118 = por %p116, %p117
      %p119 = scmp.ne.s32.totalorder %s105, %s106
      %p120 = scmp.eq.s32.totalorder %s23, 7
      %p121 = por %p119, %p120
      %p123 = scmp.ne.s32.totalorder %s106, %s122
      %p124 = scmp.eq.s32.totalorder %s23, 0
      %p125 = por %p123, %p124
      %s126 = ssub.s32 %s25, %s39
      %p127 = scmp.eq.s32.totalorder %s126, 0
      %s129 = sadd.s32 %s128, 1
      %s130 = scalar_select %p127, %s128, %s129
      %p133 = pneg %p127
      %p134 = scmp.eq.s32.totalorder %s17, 7
      %p135 = por %p133, %p134
      %p136 = scmp.ne.s32.totalorder %s128, %s131
      %p137 = scmp.eq.s32.totalorder %s17, 0
      %p138 = por %p136, %p137
      %p139 = scmp.ne.s32.totalorder %s128, %s131
      %p140 = scmp.eq.s32.totalorder %s22, 7
      %p141 = por %p139, %p140
      %p142 = scmp.ne.s32.totalorder %s131, %s132
      %p143 = scmp.eq.s32.totalorder %s22, 0
      %p144 = por %p142, %p143
      %p145 = scmp.ne.s32.totalorder %s131, %s132
      %p146 = scmp.eq.s32.totalorder %s23, 7
      %p147 = por %p145, %p146
      %p149 = scmp.ne.s32.totalorder %s132, %s148
      %p150 = scmp.eq.s32.totalorder %s23, 0
      %p151 = por %p149, %p150
      %s152 = ssub.s32 %s24, %s43
      %s153 = ssub.s32 %s25, %s39
      %s154 = sor.u32 %s152, %s153
      %p155 = scmp.eq.s32.totalorder %s154, 0
      %s157 = sadd.s32 %s156, 1
      %s158 = scalar_select %p155, %s156, %s157
      %p161 = pneg %p155
      %p162 = scmp.eq.s32.totalorder %s17, 7
      %p163 = por %p161, %p162
      %p164 = scmp.ne.s32.totalorder %s156, %s159
      %p165 = scmp.eq.s32.totalorder %s17, 0
      %p166 = por %p164, %p165
      %p167 = scmp.ne.s32.totalorder %s156, %s159
      %p168 = scmp.eq.s32.totalorder %s22, 7
      %p169 = por %p167, %p168
      %p170 = scmp.ne.s32.totalorder %s159, %s160
      %p171 = scmp.eq.s32.totalorder %s22, 0
      %p172 = por %p170, %p171
      %p173 = scmp.ne.s32.totalorder %s159, %s160
      %p174 = scmp.eq.s32.totalorder %s23, 7
      %p175 = por %p173, %p174
      %p177 = scmp.ne.s32.totalorder %s160, %s176
      %p178 = scmp.eq.s32.totalorder %s23, 0
      %p179 = por %p177, %p178
      %p180 = scmp.le.s32.totalorder 1, %s17
      %p181 = scmp.lt.s32.totalorder %s17, 9
      %p182 = pnand %p180, %p181
      %p183 = pneg %p182
      // Predicated region
      $region9: #{tpu_custom_call.1} parent=5 // pred_check
        _
      $region10: #{tpu_custom_call.1} parent=5 // pred_check_branch
        %185 = sbr.rel (%p182) target = $region12
      $region11: #{tpu_custom_call.1} parent=5 // pred_region
        %s186 = ssub.s32 %s17, 1
        // Predicated region
        $region13: #{tpu_custom_call.1} parent=11 // pred_check
          %p187 = pneg %p92
        $region14: #{tpu_custom_call.1} parent=11 // pred_check_branch
          %189 = sbr.rel (%p187) target = $region16
        $region15: #{tpu_custom_call.1} parent=11 // pred_region
          %s190 = smul.u32 32, %s29
          %192 = vsyncadd [#allocation7], 0
          %s193 = sadd.s32 %s28, %s190
          %s194 = smul.addr %s193, 4
          %s195 = scalar_lea.hbm %s1, %s194
          %s196 = sshll.u32 %s195, 4
          %s197 = int_to_ptr.hbm [resolvable:$true] %s196
          %s198 = sshll.u32 [#allocation6], 4
          %s199 = int_to_ptr.vmem [resolvable:$true] %s198
          %204 = dma.hbm_to_vmem [thread:$0]  %s197, 2048, %s199, [#allocation7], 64, 64, 4
        $region16: #{tpu_custom_call.1} parent=11 // pred_fallthru
          _
        // Predicated region
        $region17: #{tpu_custom_call.1} parent=11 // pred_check
          %p205 = pneg %p118
        $region18: #{tpu_custom_call.1} parent=11 // pred_check_branch
          %207 = sbr.rel (%p205) target = $region20
        $region19: #{tpu_custom_call.1} parent=11 // pred_region
          %p208 = scmp.lt.s32.totalorder %s28, 0
          %s209 = scalar_select %p208, %s28, 0
          %s210 = scalar_lea.vmem %s2, %s209
        $region20: #{tpu_custom_call.1} parent=11 // pred_fallthru
          _
        // Predicated region
        $region21: #{tpu_custom_call.1} parent=11 // pred_check
          %p211 = pneg %p144
        $region22: #{tpu_custom_call.1} parent=11 // pred_check_branch
          %213 = sbr.rel (%p211) target = $region24
        $region23: #{tpu_custom_call.1} parent=11 // pred_region
          %p214 = scmp.lt.s32.totalorder %s28, 0
          %s215 = scalar_select %p214, %s28, 0
          %s216 = scalar_lea.vmem %s3, %s215
        $region24: #{tpu_custom_call.1} parent=11 // pred_fallthru
          _
      $region12: #{tpu_custom_call.1} parent=5 // pred_fallthru
        _
      %p217 = scmp.lt.s32.totalorder %s17, 8
      // Predicated region
      $region25: #{tpu_custom_call.1} parent=5 // pred_check
        %p218 = pneg %p217
      $region26: #{tpu_custom_call.1} parent=5 // pred_check_branch
        %220 = sbr.rel (%p218) target = $region28
      $region27: #{tpu_custom_call.1} parent=5 // pred_region
        // Predicated region
        $region29: #{tpu_custom_call.1} parent=27 // pred_check
          %p221 = pneg %p58
        $region30: #{tpu_custom_call.1} parent=27 // pred_check_branch
          %223 = sbr.rel (%p221) target = $region32
        $region31: #{tpu_custom_call.1} parent=27 // pred_region
          %s224 = sand.u32 %s48, 1
          %s225 = scalar_lea.sflag [#allocation4], %s224
          %s226 = sand.u32 %s48, 1
          %s227 = smul.addr %s226, 256
          %s228 = scalar_lea.vmem [#allocation3], %s227
          %s229 = smul.u32 32, %s24
          %s230 = smul.u32 2, %s26
          %232 = vsyncadd %s225, 0
          %s233 = smul.addr %s229, 2
          %s234 = sadd.s32 %s230, %s233
          %s235 = smul.addr %s234, 4
          %s236 = scalar_lea.hbm %s0, %s235
          %s237 = sshll.u32 %s236, 4
          %s238 = int_to_ptr.hbm [resolvable:$true] %s237
          %s239 = sshll.u32 %s228, 4
          %s240 = int_to_ptr.vmem [resolvable:$true] %s239
          %245 = dma.hbm_to_vmem [thread:$0]  %s238, 4096, %s240, %s225, 128, 128, 8
        $region32: #{tpu_custom_call.1} parent=27 // pred_fallthru
          _
      $region28: #{tpu_custom_call.1} parent=5 // pred_fallthru
        _
      %p246 = scmp.le.s32.totalorder 1, %s17
      %p247 = scmp.lt.s32.totalorder %s17, 9
      %p248 = pnand %p246, %p247
      %p249 = pneg %p248
      // Predicated region
      $region33: #{tpu_custom_call.1} parent=5 // pred_check
        _
      $region34: #{tpu_custom_call.1} parent=5 // pred_check_branch
        %251 = sbr.rel (%p248) target = $region36
      $region35: #{tpu_custom_call.1} parent=5 // pred_region
        %s252 = ssub.s32 %s17, 1
        %s253 = sand.u32 %s51, 1
        %s254 = scalar_lea.sflag [#allocation4], %s253
        %s255 = sand.u32 %s51, 1
        %s256 = smul.addr %s255, 256
        %s257 = scalar_lea.vmem [#allocation3], %s256
        // Predicated region
        $region37: #{tpu_custom_call.1} parent=35 // pred_check
          %p258 = pneg %p64
        $region38: #{tpu_custom_call.1} parent=35 // pred_check_branch
          %260 = sbr.rel (%p258) target = $region40
        $region39: #{tpu_custom_call.1} parent=35 // pred_region
          %262 = dma.done %s254, 4096
        $region40: #{tpu_custom_call.1} parent=35 // pred_fallthru
          _
        // Predicated region
        $region41: #{tpu_custom_call.1} parent=35 // pred_check
          %p263 = pneg %p92
        $region42: #{tpu_custom_call.1} parent=35 // pred_check_branch
          %265 = sbr.rel (%p263) target = $region44
        $region43: #{tpu_custom_call.1} parent=35 // pred_region
          %267 = dma.done [#allocation7], 2048
        $region44: #{tpu_custom_call.1} parent=35 // pred_fallthru
          _
        %s268 = sand.u32 %s51, 1
        %s269 = scalar_lea.sflag [#allocation4], %s268
        %s270 = sand.u32 %s51, 1
        %s271 = smul.addr %s270, 256
        %s272 = scalar_lea.vmem [#allocation3], %s271
        %p273 = pneg %p64
        %p274 = pneg %p61
        %p275 = pneg %p92
        %p276 = pneg %p89
        %p277 = scmp.lt.s32.totalorder %s28, 0
        %s278 = scalar_select %p277, %s28, 0
        %s279 = scalar_lea.vmem %s2, %s278
        %p280 = pneg %p118
        %p281 = pneg %p115
        %p282 = scmp.lt.s32.totalorder %s28, 0
        %s283 = scalar_select %p282, %s28, 0
        %s284 = scalar_lea.vmem %s3, %s283
        %p285 = pneg %p144
        %p286 = pneg %p141
        %p287 = pneg %p172
        %p288 = pneg %p169
        %s289 = sand.u32 %s159, 1
        %s290 = scalar_lea.sflag [#allocation5], %s289
        %s291 = sand.u32 %s159, 1
        %s292 = smul.addr %s291, 128
        %s293 = scalar_lea.vmem [#allocation8], %s292
        %s294 = smul.u32 32, %s27
        %s295 = smul.u32 2, %s29
        %s296 = smul.u32 32, %s29
        %p297 = scmp.lt.s32.totalorder %s28, 0
        %s298 = scalar_select %p297, %s28, 0
        %s299 = scalar_lea.vmem %s2, %s298
        %p300 = scmp.lt.s32.totalorder %s28, 0
        %s301 = scalar_select %p300, %s28, 0
        %s302 = scalar_lea.vmem %s3, %s301
        %s303 = smul.u32 32, %s27
        %p304 = scmp.eq.s32.totalorder %s29, 0
        // Predicated region
        $region45: #{tpu_custom_call.1} parent=35 // pred_check
          %p305 = pneg %p304
        $region46: #{tpu_custom_call.1} parent=35 // pred_check_branch
          %307 = sbr.rel (%p305) target = $region48
        $region47: #{tpu_custom_call.1} parent=35 // pred_region
          %308 = vst [vmem:[#allocation2] sm:$0xff] 0.0
          %309 = vst [vmem:[#allocation2 + $0x8] sm:$0xff] 0.0
          %310 = vst [vmem:[#allocation2 + $0x10] sm:$0xff] 0.0
          %311 = vst [vmem:[#allocation2 + $0x18] sm:$0xff] 0.0
          %312 = vst [vmem:[#allocation2 + $0x20] sm:$0xff] 0.0
          %313 = vst [vmem:[#allocation2 + $0x28] sm:$0xff] 0.0
          %314 = vst [vmem:[#allocation2 + $0x30] sm:$0xff] 0.0
          %315 = vst [vmem:[#allocation2 + $0x38] sm:$0xff] 0.0
          %316 = vst [vmem:[#allocation2 + $0x40] sm:$0xff] 0.0
          %317 = vst [vmem:[#allocation2 + $0x48] sm:$0xff] 0.0
          %318 = vst [vmem:[#allocation2 + $0x50] sm:$0xff] 0.0
          %319 = vst [vmem:[#allocation2 + $0x58] sm:$0xff] 0.0
          %320 = vst [vmem:[#allocation2 + $0x60] sm:$0xff] 0.0
          %321 = vst [vmem:[#allocation2 + $0x68] sm:$0xff] 0.0
          %322 = vst [vmem:[#allocation2 + $0x70] sm:$0xff] 0.0
          %323 = vst [vmem:[#allocation2 + $0x78] sm:$0xff] 0.0
          %324 = vst [vmem:[#allocation2 + $0x80] sm:$0xff] 0.0
          %325 = vst [vmem:[#allocation2 + $0x88] sm:$0xff] 0.0
          %326 = vst [vmem:[#allocation2 + $0x90] sm:$0xff] 0.0
          %327 = vst [vmem:[#allocation2 + $0x98] sm:$0xff] 0.0
          %328 = vst [vmem:[#allocation2 + $0xa0] sm:$0xff] 0.0
          %329 = vst [vmem:[#allocation2 + $0xa8] sm:$0xff] 0.0
          %330 = vst [vmem:[#allocation2 + $0xb0] sm:$0xff] 0.0
          %331 = vst [vmem:[#allocation2 + $0xb8] sm:$0xff] 0.0
          %332 = vst [vmem:[#allocation2 + $0xc0] sm:$0xff] 0.0
          %333 = vst [vmem:[#allocation2 + $0xc8] sm:$0xff] 0.0
          %334 = vst [vmem:[#allocation2 + $0xd0] sm:$0xff] 0.0
          %335 = vst [vmem:[#allocation2 + $0xd8] sm:$0xff] 0.0
          %336 = vst [vmem:[#allocation2 + $0xe0] sm:$0xff] 0.0
          %337 = vst [vmem:[#allocation2 + $0xe8] sm:$0xff] 0.0
          %338 = vst [vmem:[#allocation2 + $0xf0] sm:$0xff] 0.0
          %339 = vst [vmem:[#allocation2 + $0xf8] sm:$0xff] 0.0
        $region48: #{tpu_custom_call.1} parent=35 // pred_fallthru
          _
        %v340 = vld [vmem:[#allocation2] sm:$0xff]
        %v341 = vld [vmem:[#allocation2 + $0x8] sm:$0xff]
        %v342 = vld [vmem:[#allocation2 + $0x10] sm:$0xff]
        %v343 = vld [vmem:[#allocation2 + $0x18] sm:$0xff]
        %v344 = vld [vmem:[#allocation2 + $0x20] sm:$0xff]
        %v345 = vld [vmem:[#allocation2 + $0x28] sm:$0xff]
        %v346 = vld [vmem:[#allocation2 + $0x30] sm:$0xff]
        %v347 = vld [vmem:[#allocation2 + $0x38] sm:$0xff]
        %v348 = vld [vmem:[#allocation2 + $0x40] sm:$0xff]
        %v349 = vld [vmem:[#allocation2 + $0x48] sm:$0xff]
        %v350 = vld [vmem:[#allocation2 + $0x50] sm:$0xff]
        %v351 = vld [vmem:[#allocation2 + $0x58] sm:$0xff]
        %v352 = vld [vmem:[#allocation2 + $0x60] sm:$0xff]
        %v353 = vld [vmem:[#allocation2 + $0x68] sm:$0xff]
        %v354 = vld [vmem:[#allocation2 + $0x70] sm:$0xff]
        %v355 = vld [vmem:[#allocation2 + $0x78] sm:$0xff]
        %v356 = vld [vmem:[#allocation2 + $0x80] sm:$0xff]
        %v357 = vld [vmem:[#allocation2 + $0x88] sm:$0xff]
        %v358 = vld [vmem:[#allocation2 + $0x90] sm:$0xff]
        %v359 = vld [vmem:[#allocation2 + $0x98] sm:$0xff]
        %v360 = vld [vmem:[#allocation2 + $0xa0] sm:$0xff]
        %v361 = vld [vmem:[#allocation2 + $0xa8] sm:$0xff]
        %v362 = vld [vmem:[#allocation2 + $0xb0] sm:$0xff]
        %v363 = vld [vmem:[#allocation2 + $0xb8] sm:$0xff]
        %v364 = vld [vmem:[#allocation2 + $0xc0] sm:$0xff]
        %v365 = vld [vmem:[#allocation2 + $0xc8] sm:$0xff]
        %v366 = vld [vmem:[#allocation2 + $0xd0] sm:$0xff]
        %v367 = vld [vmem:[#allocation2 + $0xd8] sm:$0xff]
        %v368 = vld [vmem:[#allocation2 + $0xe0] sm:$0xff]
        %v369 = vld [vmem:[#allocation2 + $0xe8] sm:$0xff]
        %v370 = vld [vmem:[#allocation2 + $0xf0] sm:$0xff]
        %v371 = vld [vmem:[#allocation2 + $0xf8] sm:$0xff]
        %v372 = vld [vmem:[%s257] sm:$0xff]
        %v373 = vld [vmem:[%s257 + $0x8] sm:$0xff]
        %v374 = vld [vmem:[%s257 + $0x10] sm:$0xff]
        %v375 = vld [vmem:[%s257 + $0x18] sm:$0xff]
        %v376 = vld [vmem:[%s257 + $0x20] sm:$0xff]
        %v377 = vld [vmem:[%s257 + $0x28] sm:$0xff]
        %v378 = vld [vmem:[%s257 + $0x30] sm:$0xff]
        %v379 = vld [vmem:[%s257 + $0x38] sm:$0xff]
        %v380 = vld [vmem:[%s257 + $0x40] sm:$0xff]
        %v381 = vld [vmem:[%s257 + $0x48] sm:$0xff]
        %v382 = vld [vmem:[%s257 + $0x50] sm:$0xff]
        %v383 = vld [vmem:[%s257 + $0x58] sm:$0xff]
        %v384 = vld [vmem:[%s257 + $0x60] sm:$0xff]
        %v385 = vld [vmem:[%s257 + $0x68] sm:$0xff]
        %v386 = vld [vmem:[%s257 + $0x70] sm:$0xff]
        %v387 = vld [vmem:[%s257 + $0x78] sm:$0xff]
        %v388 = vld [vmem:[%s257 + $0x80] sm:$0xff]
        %v389 = vld [vmem:[%s257 + $0x88] sm:$0xff]
        %v390 = vld [vmem:[%s257 + $0x90] sm:$0xff]
        %v391 = vld [vmem:[%s257 + $0x98] sm:$0xff]
        %v392 = vld [vmem:[%s257 + $0xa0] sm:$0xff]
        %v393 = vld [vmem:[%s257 + $0xa8] sm:$0xff]
        %v394 = vld [vmem:[%s257 + $0xb0] sm:$0xff]
        %v395 = vld [vmem:[%s257 + $0xb8] sm:$0xff]
        %v396 = vld [vmem:[%s257 + $0xc0] sm:$0xff]
        %v397 = vld [vmem:[%s257 + $0xc8] sm:$0xff]
        %v398 = vld [vmem:[%s257 + $0xd0] sm:$0xff]
        %v399 = vld [vmem:[%s257 + $0xd8] sm:$0xff]
        %v400 = vld [vmem:[%s257 + $0xe0] sm:$0xff]
        %v401 = vld [vmem:[%s257 + $0xe8] sm:$0xff]
        %v402 = vld [vmem:[%s257 + $0xf0] sm:$0xff]
        %v403 = vld [vmem:[%s257 + $0xf8] sm:$0xff]
        %v404 = vld [vmem:[#allocation6] sm:$0xf]
        %v405 = vld [vmem:[#allocation6 + $0x4] sm:$0xf]
        %v406 = vld [vmem:[#allocation6 + $0x8] sm:$0xf]
        %v407 = vld [vmem:[#allocation6 + $0xc] sm:$0xf]
        %v408 = vld [vmem:[#allocation6 + $0x10] sm:$0xf]
        %v409 = vld [vmem:[#allocation6 + $0x14] sm:$0xf]
        %v410 = vld [vmem:[#allocation6 + $0x18] sm:$0xf]
        %v411 = vld [vmem:[#allocation6 + $0x1c] sm:$0xf]
        %v412 = vld [vmem:[#allocation6 + $0x20] sm:$0xf]
        %v413 = vld [vmem:[#allocation6 + $0x24] sm:$0xf]
        %v414 = vld [vmem:[#allocation6 + $0x28] sm:$0xf]
        %v415 = vld [vmem:[#allocation6 + $0x2c] sm:$0xf]
        %v416 = vld [vmem:[#allocation6 + $0x30] sm:$0xf]
        %v417 = vld [vmem:[#allocation6 + $0x34] sm:$0xf]
        %v418 = vld [vmem:[#allocation6 + $0x38] sm:$0xf]
        %v419 = vld [vmem:[#allocation6 + $0x3c] sm:$0xf]
        %v420 = vld [vmem:[#allocation6 + $0x40] sm:$0xf]
        %v421 = vld [vmem:[#allocation6 + $0x44] sm:$0xf]
        %v422 = vld [vmem:[#allocation6 + $0x48] sm:$0xf]
        %v423 = vld [vmem:[#allocation6 + $0x4c] sm:$0xf]
        %v424 = vld [vmem:[#allocation6 + $0x50] sm:$0xf]
        %v425 = vld [vmem:[#allocation6 + $0x54] sm:$0xf]
        %v426 = vld [vmem:[#allocation6 + $0x58] sm:$0xf]
        %v427 = vld [vmem:[#allocation6 + $0x5c] sm:$0xf]
        %v428 = vld [vmem:[#allocation6 + $0x60] sm:$0xf]
        %v429 = vld [vmem:[#allocation6 + $0x64] sm:$0xf]
        %v430 = vld [vmem:[#allocation6 + $0x68] sm:$0xf]
        %v431 = vld [vmem:[#allocation6 + $0x6c] sm:$0xf]
        %v432 = vld [vmem:[#allocation6 + $0x70] sm:$0xf]
        %v433 = vld [vmem:[#allocation6 + $0x74] sm:$0xf]
        %v434 = vld [vmem:[#allocation6 + $0x78] sm:$0xf]
        %v435 = vld [vmem:[#allocation6 + $0x7c] sm:$0xf]
        %v468 = vunpack.c.l.b16 %v372
        %v469 = vunpack.c.h.b16 %v372
        %v470 = vunpack.c.l.b16 %v373
        %v471 = vunpack.c.h.b16 %v373
        %v472 = vunpack.c.l.b16 %v374
        %v473 = vunpack.c.h.b16 %v374
        %v474 = vunpack.c.l.b16 %v375
        %v475 = vunpack.c.h.b16 %v375
        %v476 = vunpack.c.l.b16 %v376
        %v477 = vunpack.c.h.b16 %v376
        %v478 = vunpack.c.l.b16 %v377
        %v479 = vunpack.c.h.b16 %v377
        %v480 = vunpack.c.l.b16 %v378
        %v481 = vunpack.c.h.b16 %v378
        %v482 = vunpack.c.l.b16 %v379
        %v483 = vunpack.c.h.b16 %v379
        %v484 = vunpack.c.l.b16 %v380
        %v485 = vunpack.c.h.b16 %v380
        %v486 = vunpack.c.l.b16 %v381
        %v487 = vunpack.c.h.b16 %v381
        %v488 = vunpack.c.l.b16 %v382
        %v489 = vunpack.c.h.b16 %v382
        %v490 = vunpack.c.l.b16 %v383
        %v491 = vunpack.c.h.b16 %v383
        %v492 = vunpack.c.l.b16 %v384
        %v493 = vunpack.c.h.b16 %v384
        %v494 = vunpack.c.l.b16 %v385
        %v495 = vunpack.c.h.b16 %v385
        %v496 = vunpack.c.l.b16 %v386
        %v497 = vunpack.c.h.b16 %v386
        %v498 = vunpack.c.l.b16 %v387
        %v499 = vunpack.c.h.b16 %v387
        %v500 = vunpack.c.l.b16 %v388
        %v501 = vunpack.c.h.b16 %v388
        %v502 = vunpack.c.l.b16 %v389
        %v503 = vunpack.c.h.b16 %v389
        %v504 = vunpack.c.l.b16 %v390
        %v505 = vunpack.c.h.b16 %v390
        %v506 = vunpack.c.l.b16 %v391
        %v507 = vunpack.c.h.b16 %v391
        %v508 = vunpack.c.l.b16 %v392
        %v509 = vunpack.c.h.b16 %v392
        %v510 = vunpack.c.l.b16 %v393
        %v511 = vunpack.c.h.b16 %v393
        %v512 = vunpack.c.l.b16 %v394
        %v513 = vunpack.c.h.b16 %v394
        %v514 = vunpack.c.l.b16 %v395
        %v515 = vunpack.c.h.b16 %v395
        %v516 = vunpack.c.l.b16 %v396
        %v517 = vunpack.c.h.b16 %v396
        %v518 = vunpack.c.l.b16 %v397
        %v519 = vunpack.c.h.b16 %v397
        %v520 = vunpack.c.l.b16 %v398
        %v521 = vunpack.c.h.b16 %v398
        %v522 = vunpack.c.l.b16 %v399
        %v523 = vunpack.c.h.b16 %v399
        %v524 = vunpack.c.l.b16 %v400
        %v525 = vunpack.c.h.b16 %v400
        %v526 = vunpack.c.l.b16 %v401
        %v527 = vunpack.c.h.b16 %v401
        %v528 = vunpack.c.l.b16 %v402
        %v529 = vunpack.c.h.b16 %v402
        %v530 = vunpack.c.l.b16 %v403
        %v531 = vunpack.c.h.b16 %v403
        %v532 = vpack.c.b16 %v470, %v468
        %v533 = vpack.c.b16 %v471, %v469
        %v534 = vpack.c.b16 %v474, %v472
        %v535 = vpack.c.b16 %v475, %v473
        %v536 = vpack.c.b16 %v478, %v476
        %v537 = vpack.c.b16 %v479, %v477
        %v538 = vpack.c.b16 %v482, %v480
        %v539 = vpack.c.b16 %v483, %v481
        %v540 = vpack.c.b16 %v486, %v484
        %v541 = vpack.c.b16 %v487, %v485
        %v542 = vpack.c.b16 %v490, %v488
        %v543 = vpack.c.b16 %v491, %v489
        %v544 = vpack.c.b16 %v494, %v492
        %v545 = vpack.c.b16 %v495, %v493
        %v546 = vpack.c.b16 %v498, %v496
        %v547 = vpack.c.b16 %v499, %v497
        %v548 = vpack.c.b16 %v502, %v500
        %v549 = vpack.c.b16 %v503, %v501
        %v550 = vpack.c.b16 %v506, %v504
        %v551 = vpack.c.b16 %v507, %v505
        %v552 = vpack.c.b16 %v510, %v508
        %v553 = vpack.c.b16 %v511, %v509
        %v554 = vpack.c.b16 %v514, %v512
        %v555 = vpack.c.b16 %v515, %v513
        %v556 = vpack.c.b16 %v518, %v516
        %v557 = vpack.c.b16 %v519, %v517
        %v558 = vpack.c.b16 %v522, %v520
        %v559 = vpack.c.b16 %v523, %v521
        %v560 = vpack.c.b16 %v526, %v524
        %v561 = vpack.c.b16 %v527, %v525
        %v562 = vpack.c.b16 %v530, %v528
        %v563 = vpack.c.b16 %v531, %v529
        %v628 = vunpack.c.l.b16 %v404
        %v629 = vunpack.c.l.b16 %v405
        %v630 = vunpack.c.l.b16 %v406
        %v631 = vunpack.c.l.b16 %v407
        %v632 = vunpack.c.l.b16 %v408
        %v633 = vunpack.c.l.b16 %v409
        %v634 = vunpack.c.l.b16 %v410
        %v635 = vunpack.c.l.b16 %v411
        %v636 = vunpack.c.l.b16 %v412
        %v637 = vunpack.c.l.b16 %v413
        %v638 = vunpack.c.l.b16 %v414
        %v639 = vunpack.c.l.b16 %v415
        %v640 = vunpack.c.l.b16 %v416
        %v641 = vunpack.c.l.b16 %v417
        %v642 = vunpack.c.l.b16 %v418
        %v643 = vunpack.c.l.b16 %v419
        %v644 = vunpack.c.l.b16 %v420
        %v645 = vunpack.c.l.b16 %v421
        %v646 = vunpack.c.l.b16 %v422
        %v647 = vunpack.c.l.b16 %v423
        %v648 = vunpack.c.l.b16 %v424
        %v649 = vunpack.c.l.b16 %v425
        %v650 = vunpack.c.l.b16 %v426
        %v651 = vunpack.c.l.b16 %v427
        %v652 = vunpack.c.l.b16 %v428
        %v653 = vunpack.c.l.b16 %v429
        %v654 = vunpack.c.l.b16 %v430
        %v655 = vunpack.c.l.b16 %v431
        %v656 = vunpack.c.l.b16 %v432
        %v657 = vunpack.c.l.b16 %v433
        %v658 = vunpack.c.l.b16 %v434
        %v659 = vunpack.c.l.b16 %v435
        %v660 = vpack.c.b16 %v629, %v628
        %v661 = vpack.c.b16 %v631, %v630
        %v662 = vpack.c.b16 %v633, %v632
        %v663 = vpack.c.b16 %v635, %v634
        %v664 = vpack.c.b16 %v637, %v636
        %v665 = vpack.c.b16 %v639, %v638
        %v666 = vpack.c.b16 %v641, %v640
        %v667 = vpack.c.b16 %v643, %v642
        %v668 = vpack.c.b16 %v645, %v644
        %v669 = vpack.c.b16 %v647, %v646
        %v670 = vpack.c.b16 %v649, %v648
        %v671 = vpack.c.b16 %v651, %v650
        %v672 = vpack.c.b16 %v653, %v652
        %v673 = vpack.c.b16 %v655, %v654
        %v674 = vpack.c.b16 %v657, %v656
        %v675 = vpack.c.b16 %v659, %v658
        %692 = vmatpush.bf16.msra.mxu0 %v667
        %693 = vmatpush.bf16.msra.mxu0 %v666
        %694 = vmatpush.bf16.msra.mxu0 %v665
        %695 = vmatpush.bf16.msra.mxu0 %v664
        %696 = vmatpush.bf16.msra.mxu0 %v663
        %697 = vmatpush.bf16.msra.mxu0 %v662
        %698 = vmatpush.bf16.msra.mxu0 %v661
        %699 = vmatpush.bf16.msra.mxu0 %v660
        %700 = vmatmul.bf16.gmra.mxu0 %v532
        %v701 = vpop.f32.mrf.mxu0
        %v702 = vadd.f32 0.0, %v701
        %v703 = vpop.f32.mrf.mxu0
        %v704 = vadd.f32 0.0, %v703
        %705 = vmatmul.bf16.gmra.mxu0 %v534
        %v706 = vpop.f32.mrf.mxu0
        %v707 = vadd.f32 0.0, %v706
        %v708 = vpop.f32.mrf.mxu0
        %v709 = vadd.f32 0.0, %v708
        %710 = vmatmul.bf16.gmra.mxu0 %v536
        %v711 = vpop.f32.mrf.mxu0
        %v712 = vadd.f32 0.0, %v711
        %v713 = vpop.f32.mrf.mxu0
        %v714 = vadd.f32 0.0, %v713
        %715 = vmatmul.bf16.gmra.mxu0 %v538
        %v716 = vpop.f32.mrf.mxu0
        %v717 = vadd.f32 0.0, %v716
        %v718 = vpop.f32.mrf.mxu0
        %v719 = vadd.f32 0.0, %v718
        %720 = vmatmul.bf16.gmra.mxu0 %v540
        %v721 = vpop.f32.mrf.mxu0
        %v722 = vadd.f32 0.0, %v721
        %v723 = vpop.f32.mrf.mxu0
        %v724 = vadd.f32 0.0, %v723
        %725 = vmatmul.bf16.gmra.mxu0 %v542
        %v726 = vpop.f32.mrf.mxu0
        %v727 = vadd.f32 0.0, %v726
        %v728 = vpop.f32.mrf.mxu0
        %v729 = vadd.f32 0.0, %v728
        %730 = vmatmul.bf16.gmra.mxu0 %v544
        %v731 = vpop.f32.mrf.mxu0
        %v732 = vadd.f32 0.0, %v731
        %v733 = vpop.f32.mrf.mxu0
        %v734 = vadd.f32 0.0, %v733
        %735 = vmatmul.bf16.gmra.mxu0 %v546
        %v736 = vpop.f32.mrf.mxu0
        %v737 = vadd.f32 0.0, %v736
        %v738 = vpop.f32.mrf.mxu0
        %v739 = vadd.f32 0.0, %v738
        %740 = vmatmul.bf16.gmra.mxu0 %v548
        %v741 = vpop.f32.mrf.mxu0
        %v742 = vadd.f32 0.0, %v741
        %v743 = vpop.f32.mrf.mxu0
        %v744 = vadd.f32 0.0, %v743
        %745 = vmatmul.bf16.gmra.mxu0 %v550
        %v746 = vpop.f32.mrf.mxu0
        %v747 = vadd.f32 0.0, %v746
        %v748 = vpop.f32.mrf.mxu0
        %v749 = vadd.f32 0.0, %v748
        %750 = vmatmul.bf16.gmra.mxu0 %v552
        %v751 = vpop.f32.mrf.mxu0
        %v752 = vadd.f32 0.0, %v751
        %v753 = vpop.f32.mrf.mxu0
        %v754 = vadd.f32 0.0, %v753
        %755 = vmatmul.bf16.gmra.mxu0 %v554
        %v756 = vpop.f32.mrf.mxu0
        %v757 = vadd.f32 0.0, %v756
        %v758 = vpop.f32.mrf.mxu0
        %v759 = vadd.f32 0.0, %v758
        %760 = vmatmul.bf16.gmra.mxu0 %v556
        %v761 = vpop.f32.mrf.mxu0
        %v762 = vadd.f32 0.0, %v761
        %v763 = vpop.f32.mrf.mxu0
        %v764 = vadd.f32 0.0, %v763
        %765 = vmatmul.bf16.gmra.mxu0 %v558
        %v766 = vpop.f32.mrf.mxu0
        %v767 = vadd.f32 0.0, %v766
        %v768 = vpop.f32.mrf.mxu0
        %v769 = vadd.f32 0.0, %v768
        %770 = vmatmul.bf16.gmra.mxu0 %v560
        %v771 = vpop.f32.mrf.mxu0
        %v772 = vadd.f32 0.0, %v771
        %v773 = vpop.f32.mrf.mxu0
        %v774 = vadd.f32 0.0, %v773
        %775 = vmatmul.bf16.gmra.mxu0 %v562
        %v776 = vpop.f32.mrf.mxu0
        %v777 = vadd.f32 0.0, %v776
        %v778 = vpop.f32.mrf.mxu0
        %v779 = vadd.f32 0.0, %v778
        %780 = vdwg.mxu0
        %781 = vmatpush.bf16.msra.mxu0 %v675
        %782 = vmatpush.bf16.msra.mxu0 %v674
        %783 = vmatpush.bf16.msra.mxu0 %v673
        %784 = vmatpush.bf16.msra.mxu0 %v672
        %785 = vmatpush.bf16.msra.mxu0 %v671
        %786 = vmatpush.bf16.msra.mxu0 %v670
        %787 = vmatpush.bf16.msra.mxu0 %v669
        %788 = vmatpush.bf16.msra.mxu0 %v668
        %789 = vmatmul.bf16.gmra.mxu0 %v533
        %v790 = vpop.f32.mrf.mxu0
        %v791 = vadd.f32 %v702, %v790
        %v792 = vpop.f32.mrf.mxu0
        %v793 = vadd.f32 %v704, %v792
        %794 = vmatmul.bf16.gmra.mxu0 %v535
        %v795 = vpop.f32.mrf.mxu0
        %v796 = vadd.f32 %v707, %v795
        %v797 = vpop.f32.mrf.mxu0
        %v798 = vadd.f32 %v709, %v797
        %799 = vmatmul.bf16.gmra.mxu0 %v537
        %v800 = vpop.f32.mrf.mxu0
        %v801 = vadd.f32 %v712, %v800
        %v802 = vpop.f32.mrf.mxu0
        %v803 = vadd.f32 %v714, %v802
        %804 = vmatmul.bf16.gmra.mxu0 %v539
        %v805 = vpop.f32.mrf.mxu0
        %v806 = vadd.f32 %v717, %v805
        %v807 = vpop.f32.mrf.mxu0
        %v808 = vadd.f32 %v719, %v807
        %809 = vmatmul.bf16.gmra.mxu0 %v541
        %v810 = vpop.f32.mrf.mxu0
        %v811 = vadd.f32 %v722, %v810
        %v812 = vpop.f32.mrf.mxu0
        %v813 = vadd.f32 %v724, %v812
        %814 = vmatmul.bf16.gmra.mxu0 %v543
        %v815 = vpop.f32.mrf.mxu0
        %v816 = vadd.f32 %v727, %v815
        %v817 = vpop.f32.mrf.mxu0
        %v818 = vadd.f32 %v729, %v817
        %819 = vmatmul.bf16.gmra.mxu0 %v545
        %v820 = vpop.f32.mrf.mxu0
        %v821 = vadd.f32 %v732, %v820
        %v822 = vpop.f32.mrf.mxu0
        %v823 = vadd.f32 %v734, %v822
        %824 = vmatmul.bf16.gmra.mxu0 %v547
        %v825 = vpop.f32.mrf.mxu0
        %v826 = vadd.f32 %v737, %v825
        %v827 = vpop.f32.mrf.mxu0
        %v828 = vadd.f32 %v739, %v827
        %829 = vmatmul.bf16.gmra.mxu0 %v549
        %v830 = vpop.f32.mrf.mxu0
        %v831 = vadd.f32 %v742, %v830
        %v832 = vpop.f32.mrf.mxu0
        %v833 = vadd.f32 %v744, %v832
        %834 = vmatmul.bf16.gmra.mxu0 %v551
        %v835 = vpop.f32.mrf.mxu0
        %v836 = vadd.f32 %v747, %v835
        %v837 = vpop.f32.mrf.mxu0
        %v838 = vadd.f32 %v749, %v837
        %839 = vmatmul.bf16.gmra.mxu0 %v553
        %v840 = vpop.f32.mrf.mxu0
        %v841 = vadd.f32 %v752, %v840
        %v842 = vpop.f32.mrf.mxu0
        %v843 = vadd.f32 %v754, %v842
        %844 = vmatmul.bf16.gmra.mxu0 %v555
        %v845 = vpop.f32.mrf.mxu0
        %v846 = vadd.f32 %v757, %v845
        %v847 = vpop.f32.mrf.mxu0
        %v848 = vadd.f32 %v759, %v847
        %849 = vmatmul.bf16.gmra.mxu0 %v557
        %v850 = vpop.f32.mrf.mxu0
        %v851 = vadd.f32 %v762, %v850
        %v852 = vpop.f32.mrf.mxu0
        %v853 = vadd.f32 %v764, %v852
        %854 = vmatmul.bf16.gmra.mxu0 %v559
        %v855 = vpop.f32.mrf.mxu0
        %v856 = vadd.f32 %v767, %v855
        %v857 = vpop.f32.mrf.mxu0
        %v858 = vadd.f32 %v769, %v857
        %859 = vmatmul.bf16.gmra.mxu0 %v561
        %v860 = vpop.f32.mrf.mxu0
        %v861 = vadd.f32 %v772, %v860
        %v862 = vpop.f32.mrf.mxu0
        %v863 = vadd.f32 %v774, %v862
        %864 = vmatmul.bf16.gmra.mxu0 %v563
        %v865 = vpop.f32.mrf.mxu0
        %v866 = vadd.f32 %v777, %v865
        %v867 = vpop.f32.mrf.mxu0
        %v868 = vadd.f32 %v779, %v867
        %869 = vdwg.mxu0
        %v870 = vadd.f32 %v340, %v791
        %v871 = vadd.f32 %v341, %v793
        %v872 = vadd.f32 %v342, %v796
        %v873 = vadd.f32 %v343, %v798
        %v874 = vadd.f32 %v344, %v801
        %v875 = vadd.f32 %v345, %v803
        %v876 = vadd.f32 %v346, %v806
        %v877 = vadd.f32 %v347, %v808
        %v878 = vadd.f32 %v348, %v811
        %v879 = vadd.f32 %v349, %v813
        %v880 = vadd.f32 %v350, %v816
        %v881 = vadd.f32 %v351, %v818
        %v882 = vadd.f32 %v352, %v821
        %v883 = vadd.f32 %v353, %v823
        %v884 = vadd.f32 %v354, %v826
        %v885 = vadd.f32 %v355, %v828
        %v886 = vadd.f32 %v356, %v831
        %v887 = vadd.f32 %v357, %v833
        %v888 = vadd.f32 %v358, %v836
        %v889 = vadd.f32 %v359, %v838
        %v890 = vadd.f32 %v360, %v841
        %v891 = vadd.f32 %v361, %v843
        %v892 = vadd.f32 %v362, %v846
        %v893 = vadd.f32 %v363, %v848
        %v894 = vadd.f32 %v364, %v851
        %v895 = vadd.f32 %v365, %v853
        %v896 = vadd.f32 %v366, %v856
        %v897 = vadd.f32 %v367, %v858
        %v898 = vadd.f32 %v368, %v861
        %v899 = vadd.f32 %v369, %v863
        %v900 = vadd.f32 %v370, %v866
        %v901 = vadd.f32 %v371, %v868
        %902 = vst [vmem:[#allocation2] sm:$0xff] %v870
        %903 = vst [vmem:[#allocation2 + $0x8] sm:$0xff] %v871
        %904 = vst [vmem:[#allocation2 + $0x10] sm:$0xff] %v872
        %905 = vst [vmem:[#allocation2 + $0x18] sm:$0xff] %v873
        %906 = vst [vmem:[#allocation2 + $0x20] sm:$0xff] %v874
        %907 = vst [vmem:[#allocation2 + $0x28] sm:$0xff] %v875
        %908 = vst [vmem:[#allocation2 + $0x30] sm:$0xff] %v876
        %909 = vst [vmem:[#allocation2 + $0x38] sm:$0xff] %v877
        %910 = vst [vmem:[#allocation2 + $0x40] sm:$0xff] %v878
        %911 = vst [vmem:[#allocation2 + $0x48] sm:$0xff] %v879
        %912 = vst [vmem:[#allocation2 + $0x50] sm:$0xff] %v880
        %913 = vst [vmem:[#allocation2 + $0x58] sm:$0xff] %v881
        %914 = vst [vmem:[#allocation2 + $0x60] sm:$0xff] %v882
        %915 = vst [vmem:[#allocation2 + $0x68] sm:$0xff] %v883
        %916 = vst [vmem:[#allocation2 + $0x70] sm:$0xff] %v884
        %917 = vst [vmem:[#allocation2 + $0x78] sm:$0xff] %v885
        %918 = vst [vmem:[#allocation2 + $0x80] sm:$0xff] %v886
        %919 = vst [vmem:[#allocation2 + $0x88] sm:$0xff] %v887
        %920 = vst [vmem:[#allocation2 + $0x90] sm:$0xff] %v888
        %921 = vst [vmem:[#allocation2 + $0x98] sm:$0xff] %v889
        %922 = vst [vmem:[#allocation2 + $0xa0] sm:$0xff] %v890
        %923 = vst [vmem:[#allocation2 + $0xa8] sm:$0xff] %v891
        %924 = vst [vmem:[#allocation2 + $0xb0] sm:$0xff] %v892
        %925 = vst [vmem:[#allocation2 + $0xb8] sm:$0xff] %v893
        %926 = vst [vmem:[#allocation2 + $0xc0] sm:$0xff] %v894
        %927 = vst [vmem:[#allocation2 + $0xc8] sm:$0xff] %v895
        %928 = vst [vmem:[#allocation2 + $0xd0] sm:$0xff] %v896
        %929 = vst [vmem:[#allocation2 + $0xd8] sm:$0xff] %v897
        %930 = vst [vmem:[#allocation2 + $0xe0] sm:$0xff] %v898
        %931 = vst [vmem:[#allocation2 + $0xe8] sm:$0xff] %v899
        %932 = vst [vmem:[#allocation2 + $0xf0] sm:$0xff] %v900
        %933 = vst [vmem:[#allocation2 + $0xf8] sm:$0xff] %v901
        // Predicated region
        $region49: #{tpu_custom_call.1} parent=35 // pred_check
          %p934 = pneg %p304
        $region50: #{tpu_custom_call.1} parent=35 // pred_check_branch
          %936 = sbr.rel (%p934) target = $region52
        $region51: #{tpu_custom_call.1} parent=35 // pred_region
          %v937 = vld [vmem:[#allocation2] sm:$0xff]
          %v938 = vld [vmem:[#allocation2 + $0x8] sm:$0xff]
          %v939 = vld [vmem:[#allocation2 + $0x10] sm:$0xff]
          %v940 = vld [vmem:[#allocation2 + $0x18] sm:$0xff]
          %v941 = vld [vmem:[#allocation2 + $0x20] sm:$0xff]
          %v942 = vld [vmem:[#allocation2 + $0x28] sm:$0xff]
          %v943 = vld [vmem:[#allocation2 + $0x30] sm:$0xff]
          %v944 = vld [vmem:[#allocation2 + $0x38] sm:$0xff]
          %v945 = vld [vmem:[#allocation2 + $0x40] sm:$0xff]
          %v946 = vld [vmem:[#allocation2 + $0x48] sm:$0xff]
          %v947 = vld [vmem:[#allocation2 + $0x50] sm:$0xff]
          %v948 = vld [vmem:[#allocation2 + $0x58] sm:$0xff]
          %v949 = vld [vmem:[#allocation2 + $0x60] sm:$0xff]
          %v950 = vld [vmem:[#allocation2 + $0x68] sm:$0xff]
          %v951 = vld [vmem:[#allocation2 + $0x70] sm:$0xff]
          %v952 = vld [vmem:[#allocation2 + $0x78] sm:$0xff]
          %v953 = vld [vmem:[#allocation2 + $0x80] sm:$0xff]
          %v954 = vld [vmem:[#allocation2 + $0x88] sm:$0xff]
          %v955 = vld [vmem:[#allocation2 + $0x90] sm:$0xff]
          %v956 = vld [vmem:[#allocation2 + $0x98] sm:$0xff]
          %v957 = vld [vmem:[#allocation2 + $0xa0] sm:$0xff]
          %v958 = vld [vmem:[#allocation2 + $0xa8] sm:$0xff]
          %v959 = vld [vmem:[#allocation2 + $0xb0] sm:$0xff]
          %v960 = vld [vmem:[#allocation2 + $0xb8] sm:$0xff]
          %v961 = vld [vmem:[#allocation2 + $0xc0] sm:$0xff]
          %v962 = vld [vmem:[#allocation2 + $0xc8] sm:$0xff]
          %v963 = vld [vmem:[#allocation2 + $0xd0] sm:$0xff]
          %v964 = vld [vmem:[#allocation2 + $0xd8] sm:$0xff]
          %v965 = vld [vmem:[#allocation2 + $0xe0] sm:$0xff]
          %v966 = vld [vmem:[#allocation2 + $0xe8] sm:$0xff]
          %v967 = vld [vmem:[#allocation2 + $0xf0] sm:$0xff]
          %v968 = vld [vmem:[#allocation2 + $0xf8] sm:$0xff]
          %v969 = vld [vmem:[%s299] sm:$0x1]
          %v971 = vperm.slane %v969, 0
          %v973 = vmul.f32 %v937, %v971
          %v974 = vmul.f32 %v938, %v971
          %v975 = vmul.f32 %v939, %v971
          %v976 = vmul.f32 %v940, %v971
          %v977 = vmul.f32 %v941, %v971
          %v978 = vmul.f32 %v942, %v971
          %v979 = vmul.f32 %v943, %v971
          %v980 = vmul.f32 %v944, %v971
          %v981 = vmul.f32 %v945, %v971
          %v982 = vmul.f32 %v946, %v971
          %v983 = vmul.f32 %v947, %v971
          %v984 = vmul.f32 %v948, %v971
          %v985 = vmul.f32 %v949, %v971
          %v986 = vmul.f32 %v950, %v971
          %v987 = vmul.f32 %v951, %v971
          %v988 = vmul.f32 %v952, %v971
          %v989 = vmul.f32 %v953, %v971
          %v990 = vmul.f32 %v954, %v971
          %v991 = vmul.f32 %v955, %v971
          %v992 = vmul.f32 %v956, %v971
          %v993 = vmul.f32 %v957, %v971
          %v994 = vmul.f32 %v958, %v971
          %v995 = vmul.f32 %v959, %v971
          %v996 = vmul.f32 %v960, %v971
          %v997 = vmul.f32 %v961, %v971
          %v998 = vmul.f32 %v962, %v971
          %v999 = vmul.f32 %v963, %v971
          %v1000 = vmul.f32 %v964, %v971
          %v1001 = vmul.f32 %v965, %v971
          %v1002 = vmul.f32 %v966, %v971
          %v1003 = vmul.f32 %v967, %v971
          %v1004 = vmul.f32 %v968, %v971
          %v1005 = vld [vmem:[%s302] sm:$0x1]
          %v1007 = vperm.slane %v1005, 0
          %v1009 = vadd.f32 %v973, %v1007
          %v1010 = vadd.f32 %v974, %v1007
          %v1011 = vadd.f32 %v975, %v1007
          %v1012 = vadd.f32 %v976, %v1007
          %v1013 = vadd.f32 %v977, %v1007
          %v1014 = vadd.f32 %v978, %v1007
          %v1015 = vadd.f32 %v979, %v1007
          %v1016 = vadd.f32 %v980, %v1007
          %v1017 = vadd.f32 %v981, %v1007
          %v1018 = vadd.f32 %v982, %v1007
          %v1019 = vadd.f32 %v983, %v1007
          %v1020 = vadd.f32 %v984, %v1007
          %v1021 = vadd.f32 %v985, %v1007
          %v1022 = vadd.f32 %v986, %v1007
          %v1023 = vadd.f32 %v987, %v1007
          %v1024 = vadd.f32 %v988, %v1007
          %v1025 = vadd.f32 %v989, %v1007
          %v1026 = vadd.f32 %v990, %v1007
          %v1027 = vadd.f32 %v991, %v1007
          %v1028 = vadd.f32 %v992, %v1007
          %v1029 = vadd.f32 %v993, %v1007
          %v1030 = vadd.f32 %v994, %v1007
          %v1031 = vadd.f32 %v995, %v1007
          %v1032 = vadd.f32 %v996, %v1007
          %v1033 = vadd.f32 %v997, %v1007
          %v1034 = vadd.f32 %v998, %v1007
          %v1035 = vadd.f32 %v999, %v1007
          %v1036 = vadd.f32 %v1000, %v1007
          %v1037 = vadd.f32 %v1001, %v1007
          %v1038 = vadd.f32 %v1002, %v1007
          %v1039 = vadd.f32 %v1003, %v1007
          %v1040 = vadd.f32 %v1004, %v1007
          %v1041 = vmax.f32 %v1009, 0.0
          %v1042 = vmax.f32 %v1010, 0.0
          %v1043 = vmax.f32 %v1011, 0.0
          %v1044 = vmax.f32 %v1012, 0.0
          %v1045 = vmax.f32 %v1013, 0.0
          %v1046 = vmax.f32 %v1014, 0.0
          %v1047 = vmax.f32 %v1015, 0.0
          %v1048 = vmax.f32 %v1016, 0.0
          %v1049 = vmax.f32 %v1017, 0.0
          %v1050 = vmax.f32 %v1018, 0.0
          %v1051 = vmax.f32 %v1019, 0.0
          %v1052 = vmax.f32 %v1020, 0.0
          %v1053 = vmax.f32 %v1021, 0.0
          %v1054 = vmax.f32 %v1022, 0.0
          %v1055 = vmax.f32 %v1023, 0.0
          %v1056 = vmax.f32 %v1024, 0.0
          %v1057 = vmax.f32 %v1025, 0.0
          %v1058 = vmax.f32 %v1026, 0.0
          %v1059 = vmax.f32 %v1027, 0.0
          %v1060 = vmax.f32 %v1028, 0.0
          %v1061 = vmax.f32 %v1029, 0.0
          %v1062 = vmax.f32 %v1030, 0.0
          %v1063 = vmax.f32 %v1031, 0.0
          %v1064 = vmax.f32 %v1032, 0.0
          %v1065 = vmax.f32 %v1033, 0.0
          %v1066 = vmax.f32 %v1034, 0.0
          %v1067 = vmax.f32 %v1035, 0.0
          %v1068 = vmax.f32 %v1036, 0.0
          %v1069 = vmax.f32 %v1037, 0.0
          %v1070 = vmax.f32 %v1038, 0.0
          %v1071 = vmax.f32 %v1039, 0.0
          %v1072 = vmax.f32 %v1040, 0.0
          %v1073 = vpack.c.bf16 %v1041, %v1041
          %v1074 = vpack.c.bf16 %v1042, %v1042
          %v1075 = vpack.c.bf16 %v1043, %v1043
          %v1076 = vpack.c.bf16 %v1044, %v1044
          %v1077 = vpack.c.bf16 %v1045, %v1045
          %v1078 = vpack.c.bf16 %v1046, %v1046
          %v1079 = vpack.c.bf16 %v1047, %v1047
          %v1080 = vpack.c.bf16 %v1048, %v1048
          %v1081 = vpack.c.bf16 %v1049, %v1049
          %v1082 = vpack.c.bf16 %v1050, %v1050
          %v1083 = vpack.c.bf16 %v1051, %v1051
          %v1084 = vpack.c.bf16 %v1052, %v1052
          %v1085 = vpack.c.bf16 %v1053, %v1053
          %v1086 = vpack.c.bf16 %v1054, %v1054
          %v1087 = vpack.c.bf16 %v1055, %v1055
          %v1088 = vpack.c.bf16 %v1056, %v1056
          %v1089 = vpack.c.bf16 %v1057, %v1057
          %v1090 = vpack.c.bf16 %v1058, %v1058
          %v1091 = vpack.c.bf16 %v1059, %v1059
          %v1092 = vpack.c.bf16 %v1060, %v1060
          %v1093 = vpack.c.bf16 %v1061, %v1061
          %v1094 = vpack.c.bf16 %v1062, %v1062
          %v1095 = vpack.c.bf16 %v1063, %v1063
          %v1096 = vpack.c.bf16 %v1064, %v1064
          %v1097 = vpack.c.bf16 %v1065, %v1065
          %v1098 = vpack.c.bf16 %v1066, %v1066
          %v1099 = vpack.c.bf16 %v1067, %v1067
          %v1100 = vpack.c.bf16 %v1068, %v1068
          %v1101 = vpack.c.bf16 %v1069, %v1069
          %v1102 = vpack.c.bf16 %v1070, %v1070
          %v1103 = vpack.c.bf16 %v1071, %v1071
          %v1104 = vpack.c.bf16 %v1072, %v1072
          %1105 = vst [vmem:[%s293] sm:$0xf] %v1073
          %1106 = vst [vmem:[%s293 + $0x4] sm:$0xf] %v1074
          %1107 = vst [vmem:[%s293 + $0x8] sm:$0xf] %v1075
          %1108 = vst [vmem:[%s293 + $0xc] sm:$0xf] %v1076
          %1109 = vst [vmem:[%s293 + $0x10] sm:$0xf] %v1077
          %1110 = vst [vmem:[%s293 + $0x14] sm:$0xf] %v1078
          %1111 = vst [vmem:[%s293 + $0x18] sm:$0xf] %v1079
          %1112 = vst [vmem:[%s293 + $0x1c] sm:$0xf] %v1080
          %1113 = vst [vmem:[%s293 + $0x20] sm:$0xf] %v1081
          %1114 = vst [vmem:[%s293 + $0x24] sm:$0xf] %v1082
          %1115 = vst [vmem:[%s293 + $0x28] sm:$0xf] %v1083
          %1116 = vst [vmem:[%s293 + $0x2c] sm:$0xf] %v1084
          %1117 = vst [vmem:[%s293 + $0x30] sm:$0xf] %v1085
          %1118 = vst [vmem:[%s293 + $0x34] sm:$0xf] %v1086
          %1119 = vst [vmem:[%s293 + $0x38] sm:$0xf] %v1087
          %1120 = vst [vmem:[%s293 + $0x3c] sm:$0xf] %v1088
          %1121 = vst [vmem:[%s293 + $0x40] sm:$0xf] %v1089
          %1122 = vst [vmem:[%s293 + $0x44] sm:$0xf] %v1090
          %1123 = vst [vmem:[%s293 + $0x48] sm:$0xf] %v1091
          %1124 = vst [vmem:[%s293 + $0x4c] sm:$0xf] %v1092
          %1125 = vst [vmem:[%s293 + $0x50] sm:$0xf] %v1093
          %1126 = vst [vmem:[%s293 + $0x54] sm:$0xf] %v1094
          %1127 = vst [vmem:[%s293 + $0x58] sm:$0xf] %v1095
          %1128 = vst [vmem:[%s293 + $0x5c] sm:$0xf] %v1096
          %1129 = vst [vmem:[%s293 + $0x60] sm:$0xf] %v1097
          %1130 = vst [vmem:[%s293 + $0x64] sm:$0xf] %v1098
          %1131 = vst [vmem:[%s293 + $0x68] sm:$0xf] %v1099
          %1132 = vst [vmem:[%s293 + $0x6c] sm:$0xf] %v1100
          %1133 = vst [vmem:[%s293 + $0x70] sm:$0xf] %v1101
          %1134 = vst [vmem:[%s293 + $0x74] sm:$0xf] %v1102
          %1135 = vst [vmem:[%s293 + $0x78] sm:$0xf] %v1103
          %1136 = vst [vmem:[%s293 + $0x7c] sm:$0xf] %v1104
        $region52: #{tpu_custom_call.1} parent=35 // pred_fallthru
          _
        %s1137 = sand.u32 %s159, 1
        %s1138 = scalar_lea.sflag [#allocation5], %s1137
        %s1139 = sand.u32 %s159, 1
        %s1140 = smul.addr %s1139, 128
        %s1141 = scalar_lea.vmem [#allocation8], %s1140
        // Predicated region
        $region53: #{tpu_custom_call.1} parent=35 // pred_check
          %p1142 = pneg %p169
        $region54: #{tpu_custom_call.1} parent=35 // pred_check_branch
          %1144 = sbr.rel (%p1142) target = $region56
        $region55: #{tpu_custom_call.1} parent=35 // pred_region
          %s1145 = smul.u32 32, %s27
          %1147 = vsyncadd %s1138, 0
          %s1148 = sadd.s32 %s28, %s1145
          %s1149 = smul.addr %s1148, 4
          %s1150 = scalar_lea.hbm %s4, %s1149
          %s1151 = sshll.u32 %s1141, 4
          %s1152 = int_to_ptr.vmem [resolvable:$true] %s1151
          %s1153 = sshll.u32 %s1150, 4
          %s1154 = int_to_ptr.hbm [resolvable:$true] %s1153
          %1159 = dma.vmem_to_hbm [thread:$0]  %s1152, 2048, %s1154, %s1138, 64, 64, 4
        $region56: #{tpu_custom_call.1} parent=35 // pred_fallthru
          _
      $region36: #{tpu_custom_call.1} parent=5 // pred_fallthru
        _
      %p1160 = scmp.le.s32.totalorder 2, %s17
      // Predicated region
      $region57: #{tpu_custom_call.1} parent=5 // pred_check
        %p1161 = pneg %p1160
      $region58: #{tpu_custom_call.1} parent=5 // pred_check_branch
        %1163 = sbr.rel (%p1161) target = $region60
      $region59: #{tpu_custom_call.1} parent=5 // pred_region
        %s1164 = ssub.s32 %s17, 2
        // Predicated region
        $region61: #{tpu_custom_call.1} parent=59 // pred_check
          %p1165 = pneg %p175
        $region62: #{tpu_custom_call.1} parent=59 // pred_check_branch
          %1167 = sbr.rel (%p1165) target = $region64
        $region63: #{tpu_custom_call.1} parent=59 // pred_region
          %s1168 = sand.u32 %s160, 1
          %s1169 = scalar_lea.sflag [#allocation5], %s1168
          %s1170 = sand.u32 %s160, 1
          %s1171 = smul.addr %s1170, 128
          %s1172 = scalar_lea.vmem [#allocation8], %s1171
          %1174 = dma.done %s1169, 2048
        $region64: #{tpu_custom_call.1} parent=59 // pred_fallthru
          _
      $region60: #{tpu_custom_call.1} parent=5 // pred_fallthru
        _
    $region6: #{tpu_custom_call.1} parent=1 // loop_footer
      %s21 = sadd.s32 1, %s17
    $region7: #{tpu_custom_call.1} parent=1 // loop_footer_branch
      %16 = sbr.rel target = $region3
    $region8: #{tpu_custom_call.1} parent=1 // loop_exit
      _
    %1175 = vsyncpa [#allocation4], 1
    %s1176 = scalar_lea.sflag [#allocation4], 1
    %1177 = vsyncpa %s1176, 1
    %1178 = vsyncpa [#allocation7], 1
    %1179 = vsyncpa [#allocation5], 1
    %s1180 = scalar_lea.sflag [#allocation5], 1
    %1181 = vsyncpa %s1180, 1

</llo_original>
